<compile_context>
chip_gen: v7x
topology: tpu7x:2x2x1
jax: 0.10.0
libtpu: 0.0.40
codegen_flags: <defaults>
</compile_context>

<pallas_src>
import functools

import jax
import jax.numpy as jnp
from jax import lax
from jax.experimental import pallas as pl
from jax.experimental.pallas import tpu as pltpu


def _logit_adjusted_ce_kernel(n_classes, logit_ref, bias_ref, tgt_ref, loss_ref,
                              m_sc, s_sc):
    """One (TN, TC) logits tile per grid step; online LSE over the class axis."""
    j = pl.program_id(1)          # class-tile index (top level only!)
    nj = pl.num_programs(1)
    tn, tc = logit_ref.shape

    @pl.when(j == 0)
    def _init():
        # Finite "minus infinity" so an all -inf tile cannot NaN the correction.
        m_sc[...] = jnp.full_like(m_sc, jnp.finfo(jnp.float32).min)
        s_sc[...] = jnp.zeros_like(s_sc)

    # tau * log(cls_num / sum(cls_num)) stays fully resident in VMEM; slice the
    # current class tile out of it (start is a multiple of tc, tc % 128 == 0
    # whenever there is more than one class tile).
    if bias_ref.shape[1] == tc:
        bias = bias_ref[...]
    else:
        bias = bias_ref[:, pl.ds(pl.multiple_of(j * tc, 128), tc)]

    adj = logit_ref[...].astype(jnp.float32) + bias               # (tn, tc) f32

    # Mask the class tail of the boundary block (only emitted when C % tc != 0):
    # garbage lanes must not enter the log-sum-exp.
    if n_classes % tc != 0:
        lane = lax.broadcasted_iota(jnp.int32, (tn, tc), 1)
        adj = jnp.where(lane < (n_classes - j * tc), adj, -jnp.inf)

    # Online (flash-style) log-sum-exp over the class axis.
    m_prev = m_sc[...]
    m_new = jnp.maximum(m_prev, jnp.max(adj, axis=-1, keepdims=True))
    s_sc[...] = (s_sc[...] * jnp.exp(m_prev - m_new)
                 + jnp.sum(jnp.exp(adj - m_new), axis=-1, keepdims=True))
    m_sc[...] = m_new

    @pl.when(j == nj - 1)
    def _finalize():
        # loss_i = logsumexp_c(adj_i) - adj[i, target_i]; batch-tail rows of the
        # boundary block are dropped by the masked output writeback.
        loss_ref[...] = m_sc[...] + jnp.log(s_sc[...]) - tgt_ref[...]


def logit_adjusted_loss(logit, target, cls_num_list, tau=1.0,
                        tile_n=256, tile_c=4096):
    """JAX wrapper matching LogitAdjustedLoss.forward (weight=None, mean reduction)."""
    # TODO(synk): per-class `weight` of F.cross_entropy is not wired in
    # (the reference module is constructed with weight=None).
    n, c = logit.shape
    assert tile_n % 8 == 0 and tile_c % 128 == 0

    cls_num = cls_num_list.astype(jnp.float32)
    bias_vec = jnp.float32(tau) * jnp.log(cls_num / jnp.sum(cls_num))   # (C,)

    # Full-extent blocks when the array fits one tile (any size is legal for a
    # full-extent block); otherwise (8,128)-aligned sub-blocks over a cdiv grid.
    tn = n if n <= tile_n else tile_n
    tc = c if c <= tile_c else tile_c
    nb = pl.cdiv(n, tn)
    nc = pl.cdiv(c, tc)

    # Only the tiny bias is padded (to a whole number of class tiles) so the
    # in-kernel slice never goes out of bounds.  Logits are NOT padded.
    c_res = nc * tc
    bias_p = jnp.pad(bias_vec, (0, c_res - c)).reshape(1, c_res)

    # Target logit gathered once in the wrapper (O(N) gather on the native-dtype
    # logits), so the streaming loop is a pure LSE:
    #   adj[i, t_i] = logit[i, t_i] + tau * log_cls_num[t_i]
    tgt_idx = target.astype(jnp.int32)
    tgt = (jnp.take_along_axis(logit, tgt_idx[:, None], axis=1).astype(jnp.float32)
           + bias_vec[tgt_idx][:, None])                                # (N, 1) f32

    itemsize = jnp.dtype(logit.dtype).itemsize

    per_row = pl.pallas_call(
        functools.partial(_logit_adjusted_ce_kernel, c),
        out_shape=jax.ShapeDtypeStruct((n, 1), jnp.float32),
        grid_spec=pltpu.PrefetchScalarGridSpec(
            num_scalar_prefetch=0,
            grid=(nb, nc),                                   # class axis innermost
            in_specs=[
                pl.BlockSpec((tn, tc), lambda i, j: (i, j)),   # logits, native dtype
                pl.BlockSpec((1, c_res), lambda i, j: (0, 0)), # resident bias
                pl.BlockSpec((tn, 1), lambda i, j: (i, 0)),    # gathered target logit
            ],
            out_specs=pl.BlockSpec((tn, 1), lambda i, j: (i, 0)),
            scratch_shapes=[pltpu.VMEM((tn, 1), jnp.float32)] * 2,  # running m, s
        ),
        # TODO(synk): on v7x switch the batch axis to pltpu.CORE_PARALLEL (2 TCs)
        # and sweep pipeline_mode=pl.Buffered(3) on the logits spec; kept the
        # portable settings here so the same code compiles on v5e/v6e.
        compiler_params=pltpu.CompilerParams(
            dimension_semantics=("parallel", "arbitrary"),
            vmem_limit_bytes=48 * 1024 * 1024,   # safe under v7x's 64 MiB physical
        ),
        cost_estimate=pl.CostEstimate(
            flops=5 * n * c,
            transcendentals=n * c,
            bytes_accessed=n * c * itemsize + 4 * (c_res + 3 * n),
        ),
    )(logit, bias_p, tgt)

    return jnp.sum(per_row) / jnp.float32(n)


def _reference_loss(logit, target, cls_num_list, tau=1.0):
    """Pure-JAX reference reproducing torch semantics for verification."""
    cls_num = cls_num_list.astype(jnp.float32)
    log_cls_num = jnp.log(cls_num / jnp.sum(cls_num))
    adj = logit.astype(jnp.float32) + tau * log_cls_num[None, :]
    logp = jax.nn.log_softmax(adj, axis=-1)
    nll = -jnp.take_along_axis(logp, target[:, None], axis=-1)[:, 0]
    return jnp.mean(nll)


if __name__ == "__main__":
    key = jax.random.PRNGKey(0)

    # --- Test 1: small shapes consistent with the module (single tile). ---
    N, C = 8, 16
    k1, k2, key = jax.random.split(key, 3)
    cls_num_list = jnp.arange(1, C + 1, dtype=jnp.float32) ** 2
    logit = jax.random.normal(k1, (N, C), dtype=jnp.float32)
    target = jax.random.randint(k2, (N,), 0, C, dtype=jnp.int32)

    loss = jax.block_until_ready(
        logit_adjusted_loss(logit, target, cls_num_list, tau=1.0))
    ref = _reference_loss(logit, target, cls_num_list, tau=1.0)
    assert jnp.allclose(loss, ref, rtol=1e-5, atol=1e-5), (loss, ref)

    # --- Test 2: exercise the grid (batch + class tiling, non-divisible tails,
    #             online LSE) and a zero-count class (NaN hazard check). ---
    N2, C2 = 20, 300
    k1, k2, key = jax.random.split(key, 3)
    cls_num_list2 = (jnp.arange(1, C2 + 1, dtype=jnp.float32) % 97) ** 1.5
    cls_num_list2 = cls_num_list2.at[C2 - 1].set(0.0)  # zero-count class
    logit2 = jax.random.normal(k1, (N2, C2), dtype=jnp.float32)
    target2 = jax.random.randint(k2, (N2,), 0, C2 - 1, dtype=jnp.int32)

    loss2 = jax.block_until_ready(
        logit_adjusted_loss(logit2, target2, cls_num_list2, tau=1.0,
                            tile_n=8, tile_c=128))
    ref2 = _reference_loss(logit2, target2, cls_num_list2, tau=1.0)
    assert jnp.isfinite(loss2), loss2
    assert jnp.allclose(loss2, ref2, rtol=1e-5, atol=1e-5), (loss2, ref2)

    print("KERNEL_OK")
</pallas_src>

<mosaic_0001>
module attributes {stable_mosaic.version = 11 : i64} {
  func.func @_logit_adjusted_ce_kernel(%arg0: i32, %arg1: i32, %arg2: memref<8x16xf32, #tpu.memory_space<vmem>>, %arg3: memref<1x16xf32, #tpu.memory_space<vmem>>, %arg4: memref<8x1xf32, #tpu.memory_space<vmem>>, %arg5: memref<8x1xf32, #tpu.memory_space<vmem>>, %arg6: memref<8x1xf32, #tpu.memory_space<vmem>>, %arg7: memref<8x1xf32, #tpu.memory_space<vmem>>) attributes {dimension_semantics = [#tpu.dimension_semantics<parallel>, #tpu.dimension_semantics<arbitrary>], iteration_bounds = array<i64: 1, 1>, scalar_prefetch = 0 : i64, scratch_operands = 2 : i64, tpu.core_type = #tpu.core_type<tc>, window_params = [{transform_indices = @transform_0, window_bounds = array<i64: 8, 16>}, {pipeline_mode = #tpu.pipeline_mode<synchronous>, transform_indices = @transform_1, window_bounds = array<i64: 1, 16>}, {transform_indices = @transform_2, window_bounds = array<i64: 8, 1>}, {transform_indices = @transform_3, window_bounds = array<i64: 8, 1>}]} {
    %c0_i32 = arith.constant 0 : i32
    %0 = arith.cmpi eq, %arg1, %c0_i32 : i32
    %1 = arith.extui %0 : i1 to i32
    %c0_i32_0 = arith.constant 0 : i32
    %2 = arith.cmpi ne, %1, %c0_i32_0 : i32
    scf.if %2 {
      %cst_15 = arith.constant -3.40282347E+38 : f32
      %26 = vector.broadcast %cst_15 : f32 to vector<8x1xf32>
      %c0_16 = arith.constant 0 : index
      %c0_17 = arith.constant 0 : index
      %27 = vector.load %arg6[%c0_16, %c0_17] : memref<8x1xf32, #tpu.memory_space<vmem>>, vector<8x1xf32>
      tpu.vector_store %arg6[%c0_16, %c0_17], %26 {strides = array<i32>} : memref<8x1xf32, #tpu.memory_space<vmem>>, vector<8x1xf32>,
      %cst_18 = arith.constant 0.000000e+00 : f32
      %28 = vector.broadcast %cst_18 : f32 to vector<8x1xf32>
      %c0_19 = arith.constant 0 : index
      %c0_20 = arith.constant 0 : index
      %29 = vector.load %arg7[%c0_19, %c0_20] : memref<8x1xf32, #tpu.memory_space<vmem>>, vector<8x1xf32>
      tpu.vector_store %arg7[%c0_19, %c0_20], %28 {strides = array<i32>} : memref<8x1xf32, #tpu.memory_space<vmem>>, vector<8x1xf32>,
    } else {
    }
    %c0 = arith.constant 0 : index
    %c0_1 = arith.constant 0 : index
    %3 = vector.load %arg3[%c0, %c0_1] : memref<1x16xf32, #tpu.memory_space<vmem>>, vector<1x16xf32>
    %c0_2 = arith.constant 0 : index
    %c0_3 = arith.constant 0 : index
    %4 = vector.load %arg2[%c0_2, %c0_3] : memref<8x16xf32, #tpu.memory_space<vmem>>, vector<8x16xf32>
    %5 = vector.broadcast %3 : vector<1x16xf32> to vector<8x16xf32>
    %6 = arith.addf %4, %5 : vector<8x16xf32>
    %c0_4 = arith.constant 0 : index
    %c0_5 = arith.constant 0 : index
    %7 = vector.load %arg6[%c0_4, %c0_5] : memref<8x1xf32, #tpu.memory_space<vmem>>, vector<8x1xf32>
    %cst = arith.constant dense<0xFF800000> : vector<8xf32>
    %8 = vector.multi_reduction <maximumf>, %6, %cst [1] : vector<8x16xf32> to vector<8xf32>
    %9 = vector.shape_cast %8 : vector<8xf32> to vector<8x1xf32>
    %10 = arith.maximumf %7, %9 : vector<8x1xf32>
    %c0_6 = arith.constant 0 : index
    %c0_7 = arith.constant 0 : index
    %11 = vector.load %arg7[%c0_6, %c0_7] : memref<8x1xf32, #tpu.memory_space<vmem>>, vector<8x1xf32>
    %12 = arith.subf %7, %10 : vector<8x1xf32>
    %13 = math.exp %12 : vector<8x1xf32>
    %14 = arith.mulf %11, %13 : vector<8x1xf32>
    %15 = vector.broadcast %10 : vector<8x1xf32> to vector<8x16xf32>
    %16 = arith.subf %6, %15 : vector<8x16xf32>
    %17 = math.exp %16 : vector<8x16xf32>
    %cst_8 = arith.constant dense<0.000000e+00> : vector<8xf32>
    %18 = vector.multi_reduction <add>, %17, %cst_8 [1] : vector<8x16xf32> to vector<8xf32>
    %19 = vector.shape_cast %18 : vector<8xf32> to vector<8x1xf32>
    %20 = arith.addf %14, %19 : vector<8x1xf32>
    %c0_9 = arith.constant 0 : index
    %c0_10 = arith.constant 0 : index
    %21 = vector.load %arg7[%c0_9, %c0_10] : memref<8x1xf32, #tpu.memory_space<vmem>>, vector<8x1xf32>
    tpu.vector_store %arg7[%c0_9, %c0_10], %20 {strides = array<i32>} : memref<8x1xf32, #tpu.memory_space<vmem>>, vector<8x1xf32>,
    %c0_11 = arith.constant 0 : index
    %c0_12 = arith.constant 0 : index
    %22 = vector.load %arg6[%c0_11, %c0_12] : memref<8x1xf32, #tpu.memory_space<vmem>>, vector<8x1xf32>
    tpu.vector_store %arg6[%c0_11, %c0_12], %10 {strides = array<i32>} : memref<8x1xf32, #tpu.memory_space<vmem>>, vector<8x1xf32>,
    %c0_i32_13 = arith.constant 0 : i32
    %23 = arith.cmpi eq, %arg1, %c0_i32_13 : i32
    %24 = arith.extui %23 : i1 to i32
    %c0_i32_14 = arith.constant 0 : i32
    %25 = arith.cmpi ne, %24, %c0_i32_14 : i32
    scf.if %25 {
      %c0_15 = arith.constant 0 : index
      %c0_16 = arith.constant 0 : index
      %26 = vector.load %arg6[%c0_15, %c0_16] : memref<8x1xf32, #tpu.memory_space<vmem>>, vector<8x1xf32>
      %c0_17 = arith.constant 0 : index
      %c0_18 = arith.constant 0 : index
      %27 = vector.load %arg7[%c0_17, %c0_18] : memref<8x1xf32, #tpu.memory_space<vmem>>, vector<8x1xf32>
      %28 = math.log %27 : vector<8x1xf32>
      %29 = arith.addf %26, %28 : vector<8x1xf32>
      %c0_19 = arith.constant 0 : index
      %c0_20 = arith.constant 0 : index
      %30 = vector.load %arg4[%c0_19, %c0_20] : memref<8x1xf32, #tpu.memory_space<vmem>>, vector<8x1xf32>
      %31 = arith.subf %29, %30 : vector<8x1xf32>
      %c0_21 = arith.constant 0 : index
      %c0_22 = arith.constant 0 : index
      %32 = vector.load %arg5[%c0_21, %c0_22] : memref<8x1xf32, #tpu.memory_space<vmem>>, vector<8x1xf32>
      tpu.vector_store %arg5[%c0_21, %c0_22], %31 {strides = array<i32>} : memref<8x1xf32, #tpu.memory_space<vmem>>, vector<8x1xf32>,
    } else {
    }
    return
  }
  func.func @transform_0(%arg0: i32, %arg1: i32) -> (i32, i32) {
    %c0_i32 = arith.constant 0 : i32
    return %arg0, %arg1 : i32, i32
  }
  func.func @transform_1(%arg0: i32, %arg1: i32) -> (i32, i32) {
    %c0_i32 = arith.constant 0 : i32
    %c0_i32_0 = arith.constant 0 : i32
    %c0_i32_1 = arith.constant 0 : i32
    return %c0_i32, %c0_i32_0 : i32, i32
  }
  func.func @transform_2(%arg0: i32, %arg1: i32) -> (i32, i32) {
    %c0_i32 = arith.constant 0 : i32
    %c0_i32_0 = arith.constant 0 : i32
    return %arg0, %c0_i32 : i32, i32
  }
  func.func @transform_3(%arg0: i32, %arg1: i32) -> (i32, i32) {
    %c0_i32 = arith.constant 0 : i32
    %c0_i32_0 = arith.constant 0 : i32
    return %arg0, %c0_i32 : i32, i32
  }
}

</mosaic_0001>

<llo_original>
// kernel: tpu_custom_call.1
$region0: #{tpu_custom_call.1}
  #allocation0 [shape = 'u32[]', space=smem, size = 0x4, offset = 0x4, fixed_abs, tag = 'smem constant byte address 0x4 - core index']
  #allocation1 [shape = 'u32[144,128]{1,0:T(1,128)}', space=vmem, size = 0x12000, scoped, tag = 'internal scratch']
  #allocation2 [shape = 'f32[8,1]{1,0:T(8,128)}', space=vmem, size = 0x1000, scoped, tag = 'scratch operand']
  #allocation3 [shape = 'f32[8,1]{1,0:T(8,128)}', space=vmem, size = 0x1000, scoped, tag = 'scratch operand']
  %s0 = inlined_call_operand.vmem [shape: f32[8,16], index: 0, kind: input, shape index: {}]
  %s1 = inlined_call_operand.vmem [shape: f32[1,16], index: 1, kind: input, shape index: {}]
  %s2 = inlined_call_operand.vmem [shape: f32[8,1], index: 2, kind: input, shape index: {}]
  %s3 = inlined_call_operand.vmem [shape: f32[8,1], index: 3, kind: output, shape index: {}]
  %s4 = sld [smem:[#allocation0]]
  $region30: #{tpu_custom_call.1} parent=0
    _
  %s6 = ssub.s32 1, %s4
  %s7 = scalar_select 0, %s6, %s4
  // Predicated region
  $region2: #{tpu_custom_call.1} parent=0 // pred_check
    _
  $region3: #{tpu_custom_call.1} parent=0 // pred_check_branch
    %9 = sbr.rel (0) target = $region5
  $region4: #{tpu_custom_call.1} parent=0 // pred_region
    _
  $region5: #{tpu_custom_call.1} parent=0 // pred_fallthru
    _
  // Predicated region
  $region6: #{tpu_custom_call.1} parent=0 // pred_check
    _
  $region7: #{tpu_custom_call.1} parent=0 // pred_check_branch
    %11 = sbr.rel (0) target = $region9
  $region8: #{tpu_custom_call.1} parent=0 // pred_region
    _
  $region9: #{tpu_custom_call.1} parent=0 // pred_fallthru
    _
  // Predicated region
  $region10: #{tpu_custom_call.1} parent=0 // pred_check
    _
  $region11: #{tpu_custom_call.1} parent=0 // pred_check_branch
    %13 = sbr.rel (0) target = $region13
  $region12: #{tpu_custom_call.1} parent=0 // pred_region
    _
  $region13: #{tpu_custom_call.1} parent=0 // pred_fallthru
    _
  %p14 = scmp.eq.s32.totalorder 0, 0
  // Predicated region
  $region14: #{tpu_custom_call.1} parent=0 // pred_check
    %p15 = pneg %p14
  $region15: #{tpu_custom_call.1} parent=0 // pred_check_branch
    %17 = sbr.rel (%p15) target = $region17
  $region16: #{tpu_custom_call.1} parent=0 // pred_region
    %vm18 = vcmask 7168
    %19 = vst.msk [vmem:[#allocation2] sm:$0xff] %vm18, -3.4028235e+38
    %20 = vst.msk [vmem:[#allocation3] sm:$0xff] %vm18, 0.0
  $region17: #{tpu_custom_call.1} parent=0 // pred_fallthru
    _
  %v21 = vld [vmem:[%s1] sm:$0x1]
  %v22 = vld [vmem:[%s0] sm:$0xff]
  %v24 = vlaneseq
  %v25 = vshrl.u32 %v24, 7
  %v26 = vsub.s32 0, %v25
  %v27 = vrot.slane %v21, %v26
  %v29 = vadd.f32 %v22, %v27
  %v30 = vld [vmem:[#allocation2] sm:$0xff]
  %vm31 = vcmask 130048
  %v32 = vsel %vm31, %v29, -inf
  %33 = vmax.xlane.f32.xlu0 %v32
  %v34 = vpop.xlane.xlu0 %33
  %v35 = vmax.f32 %v30, %v34
  %v36 = vld [vmem:[#allocation3] sm:$0xff]
  %v37 = vsub.f32 %v30, %v35
  %v38 = vmul.f32 %v37, 1.442695
  %v39 = vpow.pop %v38
  %v40 = vmul.f32 %v36, %v39
  %42 = vset.pattern.permute.xlu0 0
  %43 = vperm.xlu0 %42, %v35
  %v44 = vpop.permute.xlu0 %43
  %v46 = vsub.f32 %v29, %v44
  %v47 = vmul.f32 %v46, 1.442695
  %v48 = vpow.pop %v47
  %v49 = vsel %vm31, %v48, 0.0
  %50 = vadd.xlane.f32.xlu0 %v49
  %v51 = vpop.xlane.xlu0 %50
  %v52 = vadd.f32 %v40, %v51
  %vm53 = vcmask 7168
  %54 = vst.msk [vmem:[#allocation3] sm:$0xff] %vm53, %v52
  %55 = vst.msk [vmem:[#allocation2] sm:$0xff] %vm53, %v35
  // Predicated region
  $region18: #{tpu_custom_call.1} parent=0 // pred_check
    %p56 = pneg %p14
  $region19: #{tpu_custom_call.1} parent=0 // pred_check_branch
    %58 = sbr.rel (%p56) target = $region21
  $region20: #{tpu_custom_call.1} parent=0 // pred_region
    %v59 = vld [vmem:[#allocation2] sm:$0xff]
    %v60 = vld [vmem:[#allocation3] sm:$0xff]
    %v61 = vlog2.pop %v60
    %v62 = vmul.f32 %v61, 0.6931472
    %v63 = vadd.f32 %v59, %v62
    %v64 = vld [vmem:[%s2] sm:$0xff]
    %v65 = vsub.f32 %v63, %v64
    %66 = vst.msk [vmem:[%s3] sm:$0xff] %vm53, %v65
  $region21: #{tpu_custom_call.1} parent=0 // pred_fallthru
    _
  // Predicated region
  $region22: #{tpu_custom_call.1} parent=0 // pred_check
    _
  $region23: #{tpu_custom_call.1} parent=0 // pred_check_branch
    %68 = sbr.rel (0) target = $region25
  $region24: #{tpu_custom_call.1} parent=0 // pred_region
    _
  $region25: #{tpu_custom_call.1} parent=0 // pred_fallthru
    _
  // Predicated region
  $region26: #{tpu_custom_call.1} parent=0 // pred_check
    _
  $region27: #{tpu_custom_call.1} parent=0 // pred_check_branch
    %70 = sbr.rel (0) target = $region29
  $region28: #{tpu_custom_call.1} parent=0 // pred_region
    _
  $region29: #{tpu_custom_call.1} parent=0 // pred_fallthru
    _

</llo_original>
